<compile_context>
chip_gen: v6e
topology: v6e:2x2x1
jax: 0.10.0
libtpu: 0.0.40
codegen_flags: <defaults>
</compile_context>

<pallas_src>
import functools

import jax
import jax.numpy as jnp
from jax import lax
from jax.experimental import pallas as pl
from jax.experimental.pallas import tpu as pltpu


def _graph_learning_kernel(x_ref, o_ref, *, row_tile):
    """clamp -> zero diagonal -> zeros->1e-8 -> row softmax, on one (TM, N) tile."""
    x = jnp.clip(x_ref[...], 0.0, 1.0)

    # fill_diagonal_(0): global row index = block-local row + row-tile offset.
    row0 = pl.program_id(1) * row_tile
    rows = lax.broadcasted_iota(jnp.int32, x.shape, 0) + row0
    cols = lax.broadcasted_iota(jnp.int32, x.shape, 1)
    x = jnp.where(rows == cols, jnp.float32(0.0), x)

    # replace_zero: zeros -> 1e-8
    x = jnp.where(x == 0.0, jnp.float32(1e-8), x)

    # Row softmax.  x in [1e-8, 1] => exp(x) in [1, e]: no max-subtraction
    # needed.  (Only valid while the clamp above guarantees x <= 1.)
    e = jnp.exp(x)
    s = jnp.sum(e, axis=-1, keepdims=True)
    o_ref[...] = e * pl.reciprocal(s, approx=True)


def _choose_row_tile(n: int) -> int:
    """Row-tile size: multiple of 8 (sublanes), double-buffered tiles << VMEM."""
    if n % 8 != 0:
        # Second-minor block dim must be a multiple of 8 or equal the full dim.
        return n
    # 2 buffers x (1 input + 1 output) x TM x N x 4 B  <=  ~16 MiB
    budget_bytes = 16 * 1024 * 1024
    max_tm = budget_bytes // (2 * 2 * n * 4)
    tm = max(8, (max_tm // 8) * 8)
    return min(n, 512, tm)


def graph_learning_forward(w_score: jax.Array, a_score: jax.Array):
    """Returns (softmax-processed W, softmax-processed A), matching the module."""
    n = w_score.shape[0]
    assert w_score.shape == (n, n) and a_score.shape == (n, n)

    scores = jnp.stack([w_score, a_score]).astype(jnp.float32)  # (2, N, N)

    tm = _choose_row_tile(n)
    grid = (2, pl.cdiv(n, tm))

    # One matrix (squeezed leading dim), TM rows, full row on the lane axis.
    spec = pl.BlockSpec((pl.Squeezed(), tm, n), lambda m, i: (m, i, 0))

    # 2x headroom over the double-buffered in+out tiles, clamped for v7x VMEM.
    vmem_limit = min(48 * 1024 * 1024,
                     max(4 * 1024 * 1024, 2 * 2 * 2 * tm * n * 4))

    out = pl.pallas_call(
        functools.partial(_graph_learning_kernel, row_tile=tm),
        out_shape=jax.ShapeDtypeStruct((2, n, n), jnp.float32),
        grid=grid,
        in_specs=[spec],
        out_specs=spec,
        compiler_params=pltpu.CompilerParams(
            dimension_semantics=("parallel", "parallel"),
            vmem_limit_bytes=vmem_limit,
        ),
    )(scores)
    return out[0], out[1]


def _reference(w_score, a_score):
    """Pure-JAX reference for sanity check."""

    def process(x):
        x = jnp.clip(x, 0.0, 1.0)
        eye = jnp.eye(x.shape[0], dtype=bool)
        x = jnp.where(eye, 0.0, x)
        x = jnp.where(x == 0.0, 1e-8, x)
        return jax.nn.softmax(x, axis=1)

    return process(w_score), process(a_score)


if __name__ == "__main__":
    num_nodes = 16
    hidden_dim = 32  # unused by forward(); kept for parity with the module __init__

    key = jax.random.PRNGKey(0)
    kw, ka = jax.random.split(key)
    # Deterministic synthetic parameters (torch.randn equivalents).
    W_score = jax.random.normal(kw, (num_nodes, num_nodes), dtype=jnp.float32)
    A_score = jax.random.normal(ka, (num_nodes, num_nodes), dtype=jnp.float32)

    out_w, out_a = graph_learning_forward(W_score, A_score)
    jax.block_until_ready((out_w, out_a))

    ref_w, ref_a = _reference(W_score, A_score)
    # Slightly loosened tolerance to account for the EUP approximate reciprocal.
    assert jnp.allclose(out_w, ref_w, atol=5e-3, rtol=5e-3), "W mismatch"
    assert jnp.allclose(out_a, ref_a, atol=5e-3, rtol=5e-3), "A mismatch"
    # Rows of a softmax sum to 1.
    assert jnp.allclose(jnp.sum(out_w, axis=1), 1.0, atol=1e-2)
    assert jnp.allclose(jnp.sum(out_a, axis=1), 1.0, atol=1e-2)

    print("KERNEL_OK")
</pallas_src>

<mosaic_0001>
module attributes {stable_mosaic.version = 11 : i64} {
  func.func @_graph_learning_kernel(%arg0: i32, %arg1: i32, %arg2: memref<1x16x16xf32, #tpu.memory_space<vmem>>, %arg3: memref<1x16x16xf32, #tpu.memory_space<vmem>>) attributes {dimension_semantics = [#tpu.dimension_semantics<parallel>, #tpu.dimension_semantics<parallel>], iteration_bounds = array<i64: 2, 1>, scalar_prefetch = 0 : i64, scratch_operands = 0 : i64, tpu.core_type = #tpu.core_type<tc>, window_params = [{transform_indices = @transform_0, window_bounds = array<i64: 1, 16, 16>}, {transform_indices = @transform_1, window_bounds = array<i64: 1, 16, 16>}]} {
    %c0 = arith.constant 0 : index
    %c0_0 = arith.constant 0 : index
    %c0_1 = arith.constant 0 : index
    %0 = vector.load %arg2[%c0, %c0_0, %c0_1] : memref<1x16x16xf32, #tpu.memory_space<vmem>>, vector<1x16x16xf32>
    %1 = vector.shape_cast %0 : vector<1x16x16xf32> to vector<16x16xf32>
    %cst = arith.constant 0.000000e+00 : f32
    %cst_2 = arith.constant 1.000000e+00 : f32
    %2 = vector.broadcast %cst : f32 to vector<16x16xf32>
    %3 = arith.maximumf %2, %1 : vector<16x16xf32>
    %4 = vector.broadcast %cst_2 : f32 to vector<16x16xf32>
    %5 = arith.minimumf %4, %3 : vector<16x16xf32>
    %c16_i32 = arith.constant 16 : i32
    %6 = arith.muli %arg1, %c16_i32 : i32
    %7 = tpu.iota {dimensions = array<i32: 0>} : vector<16x16xi32>
    %8 = vector.broadcast %6 : i32 to vector<16x16xi32>
    %9 = arith.addi %7, %8 : vector<16x16xi32>
    %10 = tpu.iota {dimensions = array<i32: 1>} : vector<16x16xi32>
    %11 = arith.cmpi eq, %9, %10 : vector<16x16xi32>
    %cst_3 = arith.constant 0.000000e+00 : f32
    %12 = vector.broadcast %cst_3 : f32 to vector<16x16xf32>
    %13 = arith.select %11, %12, %5 : vector<16x16xi1>, vector<16x16xf32>
    %cst_4 = arith.constant 0.000000e+00 : f32
    %14 = vector.broadcast %cst_4 : f32 to vector<16x16xf32>
    %15 = arith.cmpf oeq, %13, %14 : vector<16x16xf32>
    %cst_5 = arith.constant 9.99999993E-9 : f32
    %16 = vector.broadcast %cst_5 : f32 to vector<16x16xf32>
    %17 = arith.select %15, %16, %13 : vector<16x16xi1>, vector<16x16xf32>
    %18 = math.exp %17 : vector<16x16xf32>
    %cst_6 = arith.constant dense<0.000000e+00> : vector<16xf32>
    %19 = vector.multi_reduction <add>, %18, %cst_6 [1] : vector<16x16xf32> to vector<16xf32>
    %20 = vector.shape_cast %19 : vector<16xf32> to vector<16x1xf32>
    %21 = tpu.reciprocal %20 {approx = true} : vector<16x1xf32> -> vector<16x1xf32>
    %22 = vector.broadcast %21 : vector<16x1xf32> to vector<16x16xf32>
    %23 = arith.mulf %18, %22 : vector<16x16xf32>
    %c0_7 = arith.constant 0 : index
    %c0_8 = arith.constant 0 : index
    %c0_9 = arith.constant 0 : index
    %24 = vector.load %arg3[%c0_7, %c0_8, %c0_9] : memref<1x16x16xf32, #tpu.memory_space<vmem>>, vector<1x16x16xf32>
    %25 = vector.shape_cast %24 : vector<1x16x16xf32> to vector<16x16xf32>
    %26 = vector.shape_cast %23 : vector<16x16xf32> to vector<1x16x16xf32>
    tpu.vector_store %arg3[%c0_7, %c0_8, %c0_9], %26 {strides = array<i32>} : memref<1x16x16xf32, #tpu.memory_space<vmem>>, vector<1x16x16xf32>,
    return
  }
  func.func @transform_0(%arg0: i32, %arg1: i32) -> (i32, i32, i32) {
    %c0_i32 = arith.constant 0 : i32
    %c0_i32_0 = arith.constant 0 : i32
    return %arg0, %arg1, %c0_i32 : i32, i32, i32
  }
  func.func @transform_1(%arg0: i32, %arg1: i32) -> (i32, i32, i32) {
    %c0_i32 = arith.constant 0 : i32
    %c0_i32_0 = arith.constant 0 : i32
    return %arg0, %arg1, %c0_i32 : i32, i32, i32
  }
}

</mosaic_0001>

<llo_original>
// kernel: tpu_custom_call.1
$region0: #{tpu_custom_call.1}
  #allocation0 [shape = 'u32[]', space=smem, size = 0x4, offset = 0x4, fixed_abs, tag = 'smem constant byte address 0x4 - core index']
  #allocation1 [shape = 'u32[144,128]{1,0:T(1,128)}', space=vmem, size = 0x12000, scoped, tag = 'internal scratch']
  %s0 = inlined_call_operand.hbm [shape: f32[2,16,16], index: 0, kind: input, shape index: {}]
  %s1 = inlined_call_operand.hbm [shape: f32[2,16,16], index: 1, kind: output, shape index: {}]
  %s2 = sld [smem:[#allocation0]]
  $region41: #{tpu_custom_call.1} parent=0
    _
  %s4 = ssub.s32 1, %s2
  %s5 = scalar_select 0, %s4, %s2
  $region1: #{tpu_custom_call.1} parent=0
    #allocation2 [shape = 'u8[16384]{0}', space=vmem, size = 0x4000, scoped, tag = 'input window, operand 0']
    #allocation3 [shape = 's32[2]{0}', space=sflag, size = 0x8, scoped, tag = 'scoped memory for tpu_custom_call.1']
    #allocation4 [shape = 's32[2]{0}', space=sflag, size = 0x8, scoped, tag = 'scoped memory for tpu_custom_call.1']
    #allocation5 [shape = 'u8[16384]{0}', space=vmem, size = 0x4000, scoped, tag = 'output window, operand 0']
    %6 = vsyncpa [#allocation3], 0
    %s7 = scalar_lea.sflag [#allocation3], 1
    %8 = vsyncpa %s7, 0
    %9 = vsyncpa [#allocation4], 0
    %s10 = scalar_lea.sflag [#allocation4], 1
    %11 = vsyncpa %s10, 0
    loop: start=0, step=1, limit=4
    $region2: #{tpu_custom_call.1} parent=1 // loop_pre_header
      _
    $region3: #{tpu_custom_call.1} parent=1 // loop_header
      %s13 = sphi 0, %s17
      %p14 = scmp.ge.s32.totalorder %s13, 4
      %s20 = sphi 0, %s32
      %s21 = sphi 0, %s28
      %s22 = sphi 0, %s20
      %s23 = sphi 0, %s21
      %s24 = sphi 0, %s22
      %s25 = sphi 0, %s23
      %s37 = sphi 0, %s39
      %s40 = sphi 0, %s37
      %s41 = sphi 0, %s40
      %s57 = sphi 0, %s41
      %s65 = sphi 0, %s67
      %s68 = sphi 0, %s65
      %s69 = sphi 0, %s68
      %s85 = sphi 0, %s69
    $region4: #{tpu_custom_call.1} parent=1 // loop_header_branch
      %16 = sbr.rel (%p14) target = $region8
    $region5: #{tpu_custom_call.1} parent=1 // loop_body
      %s18 = ssub.s32 %s13, 1
      %s19 = ssub.s32 %s13, 2
      %s26 = sadd.s32 1, %s21
      %p27 = scmp.ge.s32.totalorder %s26, 1
      %s28 = scalar_select %p27, 0, %s26
      %s29 = sadd.s32 1, %s20
      %s30 = scalar_select %p27, %s29, %s20
      %p31 = scmp.ge.s32.totalorder %s30, 2
      %s32 = scalar_select %p31, 0, %s30
      %s33 = ssub.s32 %s20, %s32
      %s34 = ssub.s32 %s21, %s28
      %s35 = sor.u32 %s33, %s34
      %p36 = scmp.eq.s32.totalorder %s35, 0
      %s38 = sadd.s32 %s37, 1
      %s39 = scalar_select %p36, %s37, %s38
      %p42 = pneg %p36
      %p43 = scmp.eq.s32.totalorder %s13, 1
      %p44 = por %p42, %p43
      %p45 = scmp.ne.s32.totalorder %s37, %s40
      %p46 = scmp.eq.s32.totalorder %s13, 0
      %p47 = por %p45, %p46
      %p48 = scmp.ne.s32.totalorder %s37, %s40
      %p49 = scmp.eq.s32.totalorder %s18, 1
      %p50 = por %p48, %p49
      %p51 = scmp.ne.s32.totalorder %s40, %s41
      %p52 = scmp.eq.s32.totalorder %s18, 0
      %p53 = por %p51, %p52
      %p54 = scmp.ne.s32.totalorder %s40, %s41
      %p55 = scmp.eq.s32.totalorder %s19, 1
      %p56 = por %p54, %p55
      %p58 = scmp.ne.s32.totalorder %s41, %s57
      %p59 = scmp.eq.s32.totalorder %s19, 0
      %p60 = por %p58, %p59
      %s61 = ssub.s32 %s20, %s32
      %s62 = ssub.s32 %s21, %s28
      %s63 = sor.u32 %s61, %s62
      %p64 = scmp.eq.s32.totalorder %s63, 0
      %s66 = sadd.s32 %s65, 1
      %s67 = scalar_select %p64, %s65, %s66
      %p70 = pneg %p64
      %p71 = scmp.eq.s32.totalorder %s13, 1
      %p72 = por %p70, %p71
      %p73 = scmp.ne.s32.totalorder %s65, %s68
      %p74 = scmp.eq.s32.totalorder %s13, 0
      %p75 = por %p73, %p74
      %p76 = scmp.ne.s32.totalorder %s65, %s68
      %p77 = scmp.eq.s32.totalorder %s18, 1
      %p78 = por %p76, %p77
      %p79 = scmp.ne.s32.totalorder %s68, %s69
      %p80 = scmp.eq.s32.totalorder %s18, 0
      %p81 = por %p79, %p80
      %p82 = scmp.ne.s32.totalorder %s68, %s69
      %p83 = scmp.eq.s32.totalorder %s19, 1
      %p84 = por %p82, %p83
      %p86 = scmp.ne.s32.totalorder %s69, %s85
      %p87 = scmp.eq.s32.totalorder %s19, 0
      %p88 = por %p86, %p87
      %p89 = scmp.le.s32.totalorder 1, %s13
      %p90 = scmp.lt.s32.totalorder %s13, 3
      %p91 = pnand %p89, %p90
      %p92 = pneg %p91
      // Predicated region
      $region9: #{tpu_custom_call.1} parent=5 // pred_check
        _
      $region10: #{tpu_custom_call.1} parent=5 // pred_check_branch
        %94 = sbr.rel (%p91) target = $region12
      $region11: #{tpu_custom_call.1} parent=5 // pred_region
        %s95 = ssub.s32 %s13, 1
      $region12: #{tpu_custom_call.1} parent=5 // pred_fallthru
        _
      %p96 = scmp.lt.s32.totalorder %s13, 2
      // Predicated region
      $region13: #{tpu_custom_call.1} parent=5 // pred_check
        %p97 = pneg %p96
      $region14: #{tpu_custom_call.1} parent=5 // pred_check_branch
        %99 = sbr.rel (%p97) target = $region16
      $region15: #{tpu_custom_call.1} parent=5 // pred_region
        // Predicated region
        $region17: #{tpu_custom_call.1} parent=15 // pred_check
          %p100 = pneg %p47
        $region18: #{tpu_custom_call.1} parent=15 // pred_check_branch
          %102 = sbr.rel (%p100) target = $region20
        $region19: #{tpu_custom_call.1} parent=15 // pred_region
          %s103 = sand.u32 %s37, 1
          %s104 = scalar_lea.sflag [#allocation3], %s103
          %s105 = sand.u32 %s37, 1
          %s106 = smul.addr %s105, 16
          %s107 = scalar_lea.vmem [#allocation2], %s106
          %s108 = smul.u32 2, %s21
          %s110 = ssub.s32 256, 256
          %111 = vsyncadd %s104, %s110
          %s112 = smul.addr %s20, 2
          %s113 = sadd.s32 %s108, %s112
          %s114 = smul.addr %s113, 128
          %s115 = scalar_lea.hbm %s0, %s114
          %s116 = sshll.u32 %s107, 4
          %s117 = int_to_ptr.vmem [resolvable:$true] %s116
          %122 = dma.hbm_to_vmem [thread:$0]  %s115, 256, %s117, %s104, 128, 128, 8
        $region20: #{tpu_custom_call.1} parent=15 // pred_fallthru
          _
      $region16: #{tpu_custom_call.1} parent=5 // pred_fallthru
        _
      %p123 = scmp.le.s32.totalorder 1, %s13
      %p124 = scmp.lt.s32.totalorder %s13, 3
      %p125 = pnand %p123, %p124
      %p126 = pneg %p125
      // Predicated region
      $region21: #{tpu_custom_call.1} parent=5 // pred_check
        _
      $region22: #{tpu_custom_call.1} parent=5 // pred_check_branch
        %128 = sbr.rel (%p125) target = $region24
      $region23: #{tpu_custom_call.1} parent=5 // pred_region
        %s129 = ssub.s32 %s13, 1
        %s130 = sand.u32 %s40, 1
        %s131 = scalar_lea.sflag [#allocation3], %s130
        %s132 = sand.u32 %s40, 1
        %s133 = smul.addr %s132, 16
        %s134 = scalar_lea.vmem [#allocation2], %s133
        // Predicated region
        $region25: #{tpu_custom_call.1} parent=23 // pred_check
          %p135 = pneg %p53
        $region26: #{tpu_custom_call.1} parent=23 // pred_check_branch
          %137 = sbr.rel (%p135) target = $region28
        $region27: #{tpu_custom_call.1} parent=23 // pred_region
          %138 = dma.done %s131, 256
        $region28: #{tpu_custom_call.1} parent=23 // pred_fallthru
          _
        %s139 = sand.u32 %s40, 1
        %s140 = scalar_lea.sflag [#allocation3], %s139
        %s141 = sand.u32 %s40, 1
        %s142 = smul.addr %s141, 16
        %s143 = scalar_lea.vmem [#allocation2], %s142
        %p144 = pneg %p53
        %p145 = pneg %p50
        %p146 = pneg %p81
        %p147 = pneg %p78
        %s148 = sand.u32 %s68, 1
        %s149 = scalar_lea.sflag [#allocation4], %s148
        %s150 = sand.u32 %s68, 1
        %s151 = smul.addr %s150, 16
        %s152 = scalar_lea.vmem [#allocation5], %s151
        %s153 = smul.u32 2, %s23
        %s154 = smul.u32 2, %s23
        %v155 = vld [vmem:[%s134] sm:$0xff]
        %v156 = vld [vmem:[%s134 + $0x8] sm:$0xff]
        %v157 = vmax.f32 %v155, 0.0
        %v158 = vmax.f32 %v156, 0.0
        %v159 = vmin.f32 %v157, 1.0
        %v160 = vmin.f32 %v158, 1.0
        %s161 = smul.u32 %s23, 16
        %v162 = vlaneseq
        %v163 = vshrl.u32 %v162, 7
        %v164 = vadd.s32 %v163, 8
        %v165 = vstv %s161
        %v166 = vadd.s32 %v163, %v165
        %v167 = vadd.s32 %v164, %v165
        %v168 = vlaneseq
        %v169 = vand.u32 %v168, 127
        %vm170 = vcmp.eq.s32.totalorder %v166, %v169
        %vm171 = vcmp.eq.s32.totalorder %v167, %v169
        %v172 = vsel %vm170, 0.0, %v159
        %v173 = vsel %vm171, 0.0, %v160
        %vm174 = vcmp.eq.f32.partialorder %v172, 0.0
        %vm175 = vcmp.eq.f32.partialorder %v173, 0.0
        %v176 = vsel %vm174, 1e-08, %v172
        %v177 = vsel %vm175, 1e-08, %v173
        %v178 = vmul.f32 %v176, 1.442695
        %v179 = vpow.pop %v178
        %v180 = vmul.f32 %v177, 1.442695
        %v181 = vpow.pop %v180
        %vm182 = vcmask 130048
        %v183 = vsel %vm182, %v179, 0.0
        %184 = vadd.xlane.f32.xlu0 %v183
        %v185 = vpop.xlane.xlu0 %184
        %v186 = vsel %vm182, %v181, 0.0
        %187 = vadd.xlane.f32.xlu0 %v186
        %v188 = vpop.xlane.xlu0 %187
        %v189 = vrcp.pop %v185
        %v190 = vrcp.pop %v188
        %v191 = vmul.f32 %v179, %v189
        %v192 = vmul.f32 %v181, %v190
        %193 = vst.msk [vmem:[%s152] sm:$0xff] %vm182, %v191
        %194 = vst.msk [vmem:[%s152 + $0x8] sm:$0xff] %vm182, %v192
        %s195 = sand.u32 %s68, 1
        %s196 = scalar_lea.sflag [#allocation4], %s195
        %s197 = sand.u32 %s68, 1
        %s198 = smul.addr %s197, 16
        %s199 = scalar_lea.vmem [#allocation5], %s198
        // Predicated region
        $region29: #{tpu_custom_call.1} parent=23 // pred_check
          %p200 = pneg %p78
        $region30: #{tpu_custom_call.1} parent=23 // pred_check_branch
          %202 = sbr.rel (%p200) target = $region32
        $region31: #{tpu_custom_call.1} parent=23 // pred_region
          %s203 = smul.u32 2, %s23
          %s205 = ssub.s32 256, 256
          %206 = vsyncadd %s196, %s205
          %s207 = smul.addr %s22, 2
          %s208 = sadd.s32 %s203, %s207
          %s209 = smul.addr %s208, 128
          %s210 = scalar_lea.hbm %s1, %s209
          %s211 = sshll.u32 %s199, 4
          %s212 = int_to_ptr.vmem [resolvable:$true] %s211
          %217 = dma.vmem_to_hbm [thread:$0]  %s212, 256, %s210, %s196, 128, 128, 8
        $region32: #{tpu_custom_call.1} parent=23 // pred_fallthru
          _
      $region24: #{tpu_custom_call.1} parent=5 // pred_fallthru
        _
      %p218 = scmp.le.s32.totalorder 2, %s13
      // Predicated region
      $region33: #{tpu_custom_call.1} parent=5 // pred_check
        %p219 = pneg %p218
      $region34: #{tpu_custom_call.1} parent=5 // pred_check_branch
        %221 = sbr.rel (%p219) target = $region36
      $region35: #{tpu_custom_call.1} parent=5 // pred_region
        %s222 = ssub.s32 %s13, 2
        // Predicated region
        $region37: #{tpu_custom_call.1} parent=35 // pred_check
          %p223 = pneg %p84
        $region38: #{tpu_custom_call.1} parent=35 // pred_check_branch
          %225 = sbr.rel (%p223) target = $region40
        $region39: #{tpu_custom_call.1} parent=35 // pred_region
          %s226 = sand.u32 %s69, 1
          %s227 = scalar_lea.sflag [#allocation4], %s226
          %s228 = sand.u32 %s69, 1
          %s229 = smul.addr %s228, 16
          %s230 = scalar_lea.vmem [#allocation5], %s229
          %231 = dma.done %s227, 256
        $region40: #{tpu_custom_call.1} parent=35 // pred_fallthru
          _
      $region36: #{tpu_custom_call.1} parent=5 // pred_fallthru
        _
    $region6: #{tpu_custom_call.1} parent=1 // loop_footer
      %s17 = sadd.s32 1, %s13
    $region7: #{tpu_custom_call.1} parent=1 // loop_footer_branch
      %12 = sbr.rel target = $region3
    $region8: #{tpu_custom_call.1} parent=1 // loop_exit
      _
    %232 = vsyncpa [#allocation3], 1
    %s233 = scalar_lea.sflag [#allocation3], 1
    %234 = vsyncpa %s233, 1
    %235 = vsyncpa [#allocation4], 1
    %s236 = scalar_lea.sflag [#allocation4], 1
    %237 = vsyncpa %s236, 1

</llo_original>
